<compile_context>
chip_gen: v5e
topology: v5e:2x2
jax: 0.10.0
libtpu: 0.0.40
codegen_flags: <defaults>
</compile_context>

<pallas_src>
import functools

import jax
import jax.numpy as jnp
from jax import lax
from jax.experimental import pallas as pl
from jax.experimental.pallas import tpu as pltpu

_LANES = 128


# ---------------------------------------------------------------------------
# Lane-dense path: C divides 128; flat tensor viewed as (N/128, 128).
# ---------------------------------------------------------------------------
def _kl_kernel_lane_dense(m_ref, t_ref, x_ref, out_ref, acc_ref, *,
                          group, block_rows, steps_per_chunk, n_valid_rows,
                          needs_mask):
    s = pl.program_id(1)                       # reduction step within this chunk

    @pl.when(s == 0)
    def _():
        acc_ref[...] = jnp.zeros_like(acc_ref)

    m = m_ref[...]                             # (128,128) bf16 block-diagonal ones
    t = t_ref[...].astype(jnp.float32)         # (TR, 128)
    x = x_ref[...].astype(jnp.float32)

    inv_c = jnp.float32(1.0 / group)
    inv_cm1 = jnp.float32(1.0 / (group - 1))   # unbiased std (torch.std default)

    def gsum(a):
        # Per-C-group sums broadcast back to every lane of the group, on the MXU.
        # hi/lo bf16 split -> 2 single-pass matmuls; the ones matrix is exact in
        # bf16 and the MXU accumulates in f32, so the result is ~1e-6 accurate.
        hi = a.astype(jnp.bfloat16)
        lo = (a - hi.astype(jnp.float32)).astype(jnp.bfloat16)
        return (jnp.dot(hi, m, preferred_element_type=jnp.float32)
                + jnp.dot(lo, m, preferred_element_type=jnp.float32))

    def standardize(a):
        mean = gsum(a) * inv_c
        d = a - mean
        var = gsum(d * d) * inv_cm1            # two-pass: same reduction count, exact
        return d * lax.rsqrt(var)              # (a - mean) / std

    z_t = standardize(t)
    z_x = standardize(x)
    # sum(z^2) == C-1 per group => |z| <= sqrt(C-1) <= sqrt(127): exp cannot
    # overflow, so the max-subtraction (extra cross-lane reduce) is unnecessary.
    e_t = jnp.exp(z_t)
    e_x = jnp.exp(z_x)
    se_t = gsum(e_t)                           # softmax denominators (broadcast)
    se_x = gsum(e_x)
    inv_se_t = pl.reciprocal(se_t)             # full-precision reciprocal
    p = e_t * inv_se_t                         # target softmax (reuses e_t)
    # Within a group sum(p) == 1, so summed over a group:
    #   p*(log p - log q) = p*(z_t - z_x) + log(se_x) - log(se_t)
    # The per-group log-ratio is spread uniformly (1/C per lane) so a plain sum
    # over all elements gives the exact KL sum with only ONE log per element.
    kl = p * (z_t - z_x) + inv_c * jnp.log(se_x * inv_se_t)

    if needs_mask:                             # ragged tail / duplicated clamp tiles
        tile = pl.program_id(0) * steps_per_chunk + s
        row = tile * block_rows + lax.broadcasted_iota(jnp.int32, (block_rows, 1), 0)
        kl = jnp.where(row < n_valid_rows, kl, jnp.float32(0.0))

    acc_ref[...] += jnp.sum(kl, axis=0, keepdims=True)   # (1,128) per-lane partials

    @pl.when(s == steps_per_chunk - 1)
    def _():
        out_ref[...] = acc_ref[...].reshape(out_ref.shape)   # lane-dense store


def _kl_loss_lane_dense(target, inputs, C, N, block_rows, n_chunks):
    rows = N // _LANES                          # lane-dense rows; 128//C groups per row
    t2 = target.reshape(rows, _LANES)           # pure metadata reshapes (row-major)
    x2 = inputs.reshape(rows, _LANES)

    block_rows = max(8, (block_rows // 8) * 8)
    tr = rows if rows <= block_rows else block_rows
    tiles = pl.cdiv(rows, tr)
    n_chunks = max(1, min(n_chunks, tiles))     # leading "parallel" axis (v7x 2nd TC)
    spc = pl.cdiv(tiles, n_chunks)              # reduction steps per chunk
    needs_mask = (n_chunks * spc * tr != rows)
    last_tile = tiles - 1

    # x @ M broadcasts each C-group's sum back to all of its lanes (0/1 exact in bf16).
    m = jnp.kron(jnp.eye(_LANES // C, dtype=jnp.bfloat16),
                 jnp.ones((C, C), dtype=jnp.bfloat16))

    def data_map(c, s):                         # clamp duplicated tail tiles (masked)
        return (jnp.minimum(c * spc + s, last_tile), 0)

    kernel = functools.partial(
        _kl_kernel_lane_dense, group=C, block_rows=tr, steps_per_chunk=spc,
        n_valid_rows=rows, needs_mask=needs_mask)

    out = pl.pallas_call(
        kernel,
        out_shape=jax.ShapeDtypeStruct((n_chunks, 1, _LANES), jnp.float32),
        grid_spec=pltpu.PrefetchScalarGridSpec(
            num_scalar_prefetch=0,
            grid=(n_chunks, spc),
            in_specs=[
                pl.BlockSpec((_LANES, _LANES), lambda c, s: (0, 0)),  # stays resident
                pl.BlockSpec((tr, _LANES), data_map),
                pl.BlockSpec((tr, _LANES), data_map),
            ],
            out_specs=pl.BlockSpec((1, 1, _LANES), lambda c, s: (c, 0, 0)),
            scratch_shapes=[pltpu.VMEM((1, _LANES), jnp.float32)],
        ),
        compiler_params=pltpu.CompilerParams(
            dimension_semantics=("parallel", "arbitrary"),
            vmem_limit_bytes=32 * 1024 * 1024,
        ),
    )(m, t2, x2)

    # reduction='mean' -> divide by the total number of elements.
    return jnp.sum(out) * jnp.float32(1.0 / N)


# ---------------------------------------------------------------------------
# Fallback path: C does not divide 128 -> (rows, C) blocks (lane padded).
# ---------------------------------------------------------------------------
def _kl_kernel_rows(t_ref, x_ref, out_ref, acc_ref, *, block_rows, n_valid_rows,
                    needs_mask):
    i = pl.program_id(0)

    @pl.when(i == 0)
    def _():
        acc_ref[...] = jnp.zeros_like(acc_ref)

    t = t_ref[...].astype(jnp.float32)          # (TR, C)
    x = x_ref[...].astype(jnp.float32)
    C = t.shape[1]
    inv_c = jnp.float32(1.0 / C)
    inv_cm1 = jnp.float32(1.0 / (C - 1))

    def std_log_softmax(a):
        mean = jnp.sum(a, axis=1, keepdims=True) * inv_c
        d = a - mean
        var = jnp.sum(d * d, axis=1, keepdims=True) * inv_cm1
        z = d * lax.rsqrt(var)
        mx = jnp.max(z, axis=1, keepdims=True)  # C may be large here: keep it stable
        e = jnp.exp(z - mx)
        return z - (mx + jnp.log(jnp.sum(e, axis=1, keepdims=True)))

    logp = std_log_softmax(t)
    logq = std_log_softmax(x)
    kl = jnp.exp(logp) * (logp - logq)

    if needs_mask:
        row = i * block_rows + lax.broadcasted_iota(jnp.int32, (block_rows, 1), 0)
        kl = jnp.where(row < n_valid_rows, kl, jnp.float32(0.0))

    acc_ref[...] += jnp.sum(kl, keepdims=True)

    @pl.when(i == pl.num_programs(0) - 1)
    def _():
        out_ref[...] = acc_ref[...]


def _kl_loss_rowmajor(target, inputs, C, N):
    rows = N // C
    t2 = target.reshape(rows, C)
    x2 = inputs.reshape(rows, C)

    # ~2 MiB f32 of real data per input block, rounded to a sublane multiple.
    tr_target = max(8, ((1 << 19) // max(C, 1)) // 8 * 8)
    tr = rows if rows <= tr_target else tr_target
    grid = (pl.cdiv(rows, tr),)
    needs_mask = (grid[0] * tr != rows)

    kernel = functools.partial(_kl_kernel_rows, block_rows=tr, n_valid_rows=rows,
                               needs_mask=needs_mask)

    out = pl.pallas_call(
        kernel,
        out_shape=jax.ShapeDtypeStruct((1, 1), jnp.float32),
        grid_spec=pltpu.PrefetchScalarGridSpec(
            num_scalar_prefetch=0,
            grid=grid,
            in_specs=[pl.BlockSpec((tr, C), lambda i: (i, 0)),
                      pl.BlockSpec((tr, C), lambda i: (i, 0))],
            out_specs=pl.BlockSpec((1, 1), lambda i: (0, 0)),
            scratch_shapes=[pltpu.VMEM((1, 1), jnp.float32)],
        ),
        compiler_params=pltpu.CompilerParams(
            dimension_semantics=("arbitrary",),
            vmem_limit_bytes=32 * 1024 * 1024,
        ),
    )(t2, x2)
    return out[0, 0] * jnp.float32(1.0 / N)


# ---------------------------------------------------------------------------
# Public wrapper.
# ---------------------------------------------------------------------------
def kl_loss_pallas(target, inputs, *, block_rows=2048, n_chunks=2):
    """KLLossFunc.forward(target, inputs) as Pallas TPU kernels. Returns scalar f32."""
    assert target.shape == inputs.shape
    B, C, H, W = inputs.shape
    assert C >= 2, "unbiased std (ddof=1) needs at least 2 elements per group"
    N = B * C * H * W

    if C <= _LANES and _LANES % C == 0 and N % _LANES == 0:
        return _kl_loss_lane_dense(target, inputs, C, N, block_rows, n_chunks)
    # TODO(synk): C that does not divide 128 uses a lane-padded (rows, C) layout.
    return _kl_loss_rowmajor(target, inputs, C, N)


def kl_loss_ref(target, inputs):
    """Pure-JAX reference mirroring the PyTorch module exactly."""
    B, C, H, W = inputs.shape
    t = target.reshape(-1, C).astype(jnp.float32)
    x = inputs.reshape(-1, C).astype(jnp.float32)

    def standardize(a):
        mean = jnp.mean(a, axis=1, keepdims=True)
        std = jnp.std(a, axis=1, ddof=1, keepdims=True)
        return (a - mean) / std

    p = jax.nn.softmax(standardize(t), axis=1)
    q = jax.nn.softmax(standardize(x), axis=1)
    return jnp.mean(p * (jnp.log(p) - jnp.log(q)))   # reduction='mean'


if __name__ == "__main__":
    key = jax.random.PRNGKey(0)
    k1, k2 = jax.random.split(key)

    # Main case (module-implied shapes): lane-dense path, single tile.
    B, C, H, W = 2, 4, 16, 16
    target = jax.random.normal(k1, (B, C, H, W), dtype=jnp.float32)
    inputs = jax.random.normal(k2, (B, C, H, W), dtype=jnp.float32)
    out = jax.block_until_ready(kl_loss_pallas(target, inputs))
    ref = kl_loss_ref(target, inputs)
    assert jnp.allclose(out, ref, atol=1e-5, rtol=1e-4), (out, ref)

    # Multi-tile + dual-chunk (parallel axis) + ragged-tail masking path.
    k3, k4 = jax.random.split(k1)
    t2 = jax.random.normal(k3, (2, 4, 16, 24), dtype=jnp.float32)
    x2 = jax.random.normal(k4, (2, 4, 16, 24), dtype=jnp.float32)
    out2 = jax.block_until_ready(kl_loss_pallas(t2, x2, block_rows=8, n_chunks=2))
    ref2 = kl_loss_ref(t2, x2)
    assert jnp.allclose(out2, ref2, atol=1e-5, rtol=1e-4), (out2, ref2)

    # Fallback path (C does not divide 128).
    k5, k6 = jax.random.split(k2)
    t3 = jax.random.normal(k5, (2, 6, 8, 9), dtype=jnp.float32)
    x3 = jax.random.normal(k6, (2, 6, 8, 9), dtype=jnp.float32)
    out3 = jax.block_until_ready(kl_loss_pallas(t3, x3))
    ref3 = kl_loss_ref(t3, x3)
    assert jnp.allclose(out3, ref3, atol=1e-5, rtol=1e-4), (out3, ref3)

    print("KERNEL_OK")
</pallas_src>

<mosaic_0001>
module attributes {stable_mosaic.version = 11 : i64} {
  func.func @_kl_kernel_lane_dense(%arg0: i32, %arg1: i32, %arg2: memref<128x128xbf16, #tpu.memory_space<vmem>>, %arg3: memref<16x128xf32, #tpu.memory_space<vmem>>, %arg4: memref<16x128xf32, #tpu.memory_space<vmem>>, %arg5: memref<1x1x128xf32, #tpu.memory_space<vmem>>, %arg6: memref<1x128xf32, #tpu.memory_space<vmem>>) attributes {dimension_semantics = [#tpu.dimension_semantics<parallel>, #tpu.dimension_semantics<arbitrary>], iteration_bounds = array<i64: 1, 1>, scalar_prefetch = 0 : i64, scratch_operands = 1 : i64, tpu.core_type = #tpu.core_type<tc>, window_params = [{pipeline_mode = #tpu.pipeline_mode<synchronous>, transform_indices = @transform_0, window_bounds = array<i64: 128, 128>}, {transform_indices = @transform_1, window_bounds = array<i64: 16, 128>}, {transform_indices = @transform_2, window_bounds = array<i64: 16, 128>}, {transform_indices = @transform_3, window_bounds = array<i64: 1, 1, 128>}]} {
    %c0_i32 = arith.constant 0 : i32
    %0 = arith.cmpi eq, %arg1, %c0_i32 : i32
    %1 = arith.extui %0 : i1 to i32
    %c0_i32_0 = arith.constant 0 : i32
    %2 = arith.cmpi ne, %1, %c0_i32_0 : i32
    scf.if %2 {
      %cst_29 = arith.constant 0.000000e+00 : f32
      %83 = vector.broadcast %cst_29 : f32 to vector<1x128xf32>
      %c0_30 = arith.constant 0 : index
      %c0_31 = arith.constant 0 : index
      %84 = vector.load %arg6[%c0_30, %c0_31] : memref<1x128xf32, #tpu.memory_space<vmem>>, vector<1x128xf32>
      tpu.vector_store %arg6[%c0_30, %c0_31], %83 {strides = array<i32>} : memref<1x128xf32, #tpu.memory_space<vmem>>, vector<1x128xf32>,
    } else {
    }
    %c0 = arith.constant 0 : index
    %c0_1 = arith.constant 0 : index
    %3 = vector.load %arg2[%c0, %c0_1] : memref<128x128xbf16, #tpu.memory_space<vmem>>, vector<128x128xbf16>
    %c0_2 = arith.constant 0 : index
    %c0_3 = arith.constant 0 : index
    %4 = vector.load %arg3[%c0_2, %c0_3] : memref<16x128xf32, #tpu.memory_space<vmem>>, vector<16x128xf32>
    %c0_4 = arith.constant 0 : index
    %c0_5 = arith.constant 0 : index
    %5 = vector.load %arg4[%c0_4, %c0_5] : memref<16x128xf32, #tpu.memory_space<vmem>>, vector<16x128xf32>
    %6 = arith.truncf %4 : vector<16x128xf32> to vector<16x128xbf16>
    %7 = arith.extf %6 : vector<16x128xbf16> to vector<16x128xf32>
    %8 = arith.subf %4, %7 : vector<16x128xf32>
    %9 = arith.truncf %8 : vector<16x128xf32> to vector<16x128xbf16>
    %cst = arith.constant dense<0.000000e+00> : vector<16x128xf32>
    %10 = tpu.matmul %6, %3, %cst {dimension_numbers = #tpu.dot_dimension_numbers<[1], [0], [0], [1], [0, 0, 1, 1], [], []>} : vector<16x128xbf16>, vector<128x128xbf16>, vector<16x128xf32> -> vector<16x128xf32>
    %cst_6 = arith.constant dense<0.000000e+00> : vector<16x128xf32>
    %11 = tpu.matmul %9, %3, %cst_6 {dimension_numbers = #tpu.dot_dimension_numbers<[1], [0], [0], [1], [0, 0, 1, 1], [], []>} : vector<16x128xbf16>, vector<128x128xbf16>, vector<16x128xf32> -> vector<16x128xf32>
    %12 = arith.addf %10, %11 : vector<16x128xf32>
    %cst_7 = arith.constant 2.500000e-01 : f32
    %13 = vector.broadcast %cst_7 : f32 to vector<16x128xf32>
    %14 = arith.mulf %12, %13 : vector<16x128xf32>
    %15 = arith.subf %4, %14 : vector<16x128xf32>
    %16 = arith.mulf %15, %15 : vector<16x128xf32>
    %17 = arith.truncf %16 : vector<16x128xf32> to vector<16x128xbf16>
    %18 = arith.extf %17 : vector<16x128xbf16> to vector<16x128xf32>
    %19 = arith.subf %16, %18 : vector<16x128xf32>
    %20 = arith.truncf %19 : vector<16x128xf32> to vector<16x128xbf16>
    %cst_8 = arith.constant dense<0.000000e+00> : vector<16x128xf32>
    %21 = tpu.matmul %17, %3, %cst_8 {dimension_numbers = #tpu.dot_dimension_numbers<[1], [0], [0], [1], [0, 0, 1, 1], [], []>} : vector<16x128xbf16>, vector<128x128xbf16>, vector<16x128xf32> -> vector<16x128xf32>
    %cst_9 = arith.constant dense<0.000000e+00> : vector<16x128xf32>
    %22 = tpu.matmul %20, %3, %cst_9 {dimension_numbers = #tpu.dot_dimension_numbers<[1], [0], [0], [1], [0, 0, 1, 1], [], []>} : vector<16x128xbf16>, vector<128x128xbf16>, vector<16x128xf32> -> vector<16x128xf32>
    %23 = arith.addf %21, %22 : vector<16x128xf32>
    %cst_10 = arith.constant 0.333333343 : f32
    %24 = vector.broadcast %cst_10 : f32 to vector<16x128xf32>
    %25 = arith.mulf %23, %24 : vector<16x128xf32>
    %26 = math.rsqrt %25 : vector<16x128xf32>
    %27 = arith.mulf %15, %26 : vector<16x128xf32>
    %28 = arith.truncf %5 : vector<16x128xf32> to vector<16x128xbf16>
    %29 = arith.extf %28 : vector<16x128xbf16> to vector<16x128xf32>
    %30 = arith.subf %5, %29 : vector<16x128xf32>
    %31 = arith.truncf %30 : vector<16x128xf32> to vector<16x128xbf16>
    %cst_11 = arith.constant dense<0.000000e+00> : vector<16x128xf32>
    %32 = tpu.matmul %28, %3, %cst_11 {dimension_numbers = #tpu.dot_dimension_numbers<[1], [0], [0], [1], [0, 0, 1, 1], [], []>} : vector<16x128xbf16>, vector<128x128xbf16>, vector<16x128xf32> -> vector<16x128xf32>
    %cst_12 = arith.constant dense<0.000000e+00> : vector<16x128xf32>
    %33 = tpu.matmul %31, %3, %cst_12 {dimension_numbers = #tpu.dot_dimension_numbers<[1], [0], [0], [1], [0, 0, 1, 1], [], []>} : vector<16x128xbf16>, vector<128x128xbf16>, vector<16x128xf32> -> vector<16x128xf32>
    %34 = arith.addf %32, %33 : vector<16x128xf32>
    %cst_13 = arith.constant 2.500000e-01 : f32
    %35 = vector.broadcast %cst_13 : f32 to vector<16x128xf32>
    %36 = arith.mulf %34, %35 : vector<16x128xf32>
    %37 = arith.subf %5, %36 : vector<16x128xf32>
    %38 = arith.mulf %37, %37 : vector<16x128xf32>
    %39 = arith.truncf %38 : vector<16x128xf32> to vector<16x128xbf16>
    %40 = arith.extf %39 : vector<16x128xbf16> to vector<16x128xf32>
    %41 = arith.subf %38, %40 : vector<16x128xf32>
    %42 = arith.truncf %41 : vector<16x128xf32> to vector<16x128xbf16>
    %cst_14 = arith.constant dense<0.000000e+00> : vector<16x128xf32>
    %43 = tpu.matmul %39, %3, %cst_14 {dimension_numbers = #tpu.dot_dimension_numbers<[1], [0], [0], [1], [0, 0, 1, 1], [], []>} : vector<16x128xbf16>, vector<128x128xbf16>, vector<16x128xf32> -> vector<16x128xf32>
    %cst_15 = arith.constant dense<0.000000e+00> : vector<16x128xf32>
    %44 = tpu.matmul %42, %3, %cst_15 {dimension_numbers = #tpu.dot_dimension_numbers<[1], [0], [0], [1], [0, 0, 1, 1], [], []>} : vector<16x128xbf16>, vector<128x128xbf16>, vector<16x128xf32> -> vector<16x128xf32>
    %45 = arith.addf %43, %44 : vector<16x128xf32>
    %cst_16 = arith.constant 0.333333343 : f32
    %46 = vector.broadcast %cst_16 : f32 to vector<16x128xf32>
    %47 = arith.mulf %45, %46 : vector<16x128xf32>
    %48 = math.rsqrt %47 : vector<16x128xf32>
    %49 = arith.mulf %37, %48 : vector<16x128xf32>
    %50 = math.exp %27 : vector<16x128xf32>
    %51 = math.exp %49 : vector<16x128xf32>
    %52 = arith.truncf %50 : vector<16x128xf32> to vector<16x128xbf16>
    %53 = arith.extf %52 : vector<16x128xbf16> to vector<16x128xf32>
    %54 = arith.subf %50, %53 : vector<16x128xf32>
    %55 = arith.truncf %54 : vector<16x128xf32> to vector<16x128xbf16>
    %cst_17 = arith.constant dense<0.000000e+00> : vector<16x128xf32>
    %56 = tpu.matmul %52, %3, %cst_17 {dimension_numbers = #tpu.dot_dimension_numbers<[1], [0], [0], [1], [0, 0, 1, 1], [], []>} : vector<16x128xbf16>, vector<128x128xbf16>, vector<16x128xf32> -> vector<16x128xf32>
    %cst_18 = arith.constant dense<0.000000e+00> : vector<16x128xf32>
    %57 = tpu.matmul %55, %3, %cst_18 {dimension_numbers = #tpu.dot_dimension_numbers<[1], [0], [0], [1], [0, 0, 1, 1], [], []>} : vector<16x128xbf16>, vector<128x128xbf16>, vector<16x128xf32> -> vector<16x128xf32>
    %58 = arith.addf %56, %57 : vector<16x128xf32>
    %59 = arith.truncf %51 : vector<16x128xf32> to vector<16x128xbf16>
    %60 = arith.extf %59 : vector<16x128xbf16> to vector<16x128xf32>
    %61 = arith.subf %51, %60 : vector<16x128xf32>
    %62 = arith.truncf %61 : vector<16x128xf32> to vector<16x128xbf16>
    %cst_19 = arith.constant dense<0.000000e+00> : vector<16x128xf32>
    %63 = tpu.matmul %59, %3, %cst_19 {dimension_numbers = #tpu.dot_dimension_numbers<[1], [0], [0], [1], [0, 0, 1, 1], [], []>} : vector<16x128xbf16>, vector<128x128xbf16>, vector<16x128xf32> -> vector<16x128xf32>
    %cst_20 = arith.constant dense<0.000000e+00> : vector<16x128xf32>
    %64 = tpu.matmul %62, %3, %cst_20 {dimension_numbers = #tpu.dot_dimension_numbers<[1], [0], [0], [1], [0, 0, 1, 1], [], []>} : vector<16x128xbf16>, vector<128x128xbf16>, vector<16x128xf32> -> vector<16x128xf32>
    %65 = arith.addf %63, %64 : vector<16x128xf32>
    %66 = tpu.reciprocal %58 : vector<16x128xf32> -> vector<16x128xf32>
    %67 = arith.mulf %50, %66 : vector<16x128xf32>
    %68 = arith.subf %27, %49 : vector<16x128xf32>
    %69 = arith.mulf %67, %68 : vector<16x128xf32>
    %70 = arith.mulf %65, %66 : vector<16x128xf32>
    %71 = math.log %70 : vector<16x128xf32>
    %cst_21 = arith.constant 2.500000e-01 : f32
    %72 = vector.broadcast %cst_21 : f32 to vector<16x128xf32>
    %73 = arith.mulf %72, %71 : vector<16x128xf32>
    %74 = arith.addf %69, %73 : vector<16x128xf32>
    %c0_22 = arith.constant 0 : index
    %c0_23 = arith.constant 0 : index
    %75 = vector.load %arg6[%c0_22, %c0_23] : memref<1x128xf32, #tpu.memory_space<vmem>>, vector<1x128xf32>
    %cst_24 = arith.constant dense<0.000000e+00> : vector<128xf32>
    %76 = vector.multi_reduction <add>, %74, %cst_24 [0] : vector<16x128xf32> to vector<128xf32>
    %77 = vector.shape_cast %76 : vector<128xf32> to vector<1x128xf32>
    %78 = arith.addf %75, %77 : vector<1x128xf32>
    %c0_25 = arith.constant 0 : index
    %c0_26 = arith.constant 0 : index
    %79 = vector.load %arg6[%c0_25, %c0_26] : memref<1x128xf32, #tpu.memory_space<vmem>>, vector<1x128xf32>
    tpu.vector_store %arg6[%c0_25, %c0_26], %78 {strides = array<i32>} : memref<1x128xf32, #tpu.memory_space<vmem>>, vector<1x128xf32>,
    %c0_i32_27 = arith.constant 0 : i32
    %80 = arith.cmpi eq, %arg1, %c0_i32_27 : i32
    %81 = arith.extui %80 : i1 to i32
    %c0_i32_28 = arith.constant 0 : i32
    %82 = arith.cmpi ne, %81, %c0_i32_28 : i32
    scf.if %82 {
      %c0_29 = arith.constant 0 : index
      %c0_30 = arith.constant 0 : index
      %83 = vector.load %arg6[%c0_29, %c0_30] : memref<1x128xf32, #tpu.memory_space<vmem>>, vector<1x128xf32>
      %84 = vector.shape_cast %83 : vector<1x128xf32> to vector<1x1x128xf32>
      %c0_31 = arith.constant 0 : index
      %c0_32 = arith.constant 0 : index
      %c0_33 = arith.constant 0 : index
      %85 = vector.load %arg5[%c0_31, %c0_32, %c0_33] : memref<1x1x128xf32, #tpu.memory_space<vmem>>, vector<1x1x128xf32>
      tpu.vector_store %arg5[%c0_31, %c0_32, %c0_33], %84 {strides = array<i32>} : memref<1x1x128xf32, #tpu.memory_space<vmem>>, vector<1x1x128xf32>,
    } else {
    }
    return
  }
  func.func @transform_0(%arg0: i32, %arg1: i32) -> (i32, i32) {
    %c0_i32 = arith.constant 0 : i32
    %c0_i32_0 = arith.constant 0 : i32
    %c0_i32_1 = arith.constant 0 : i32
    return %c0_i32, %c0_i32_0 : i32, i32
  }
  func.func @transform_1(%arg0: i32, %arg1: i32) -> (i32, i32) {
    %c1_i32 = arith.constant 1 : i32
    %0 = arith.muli %arg0, %c1_i32 : i32
    %1 = arith.addi %0, %arg1 : i32
    %c0_i32 = arith.constant 0 : i32
    %2 = arith.minsi %1, %c0_i32 : i32
    %c0_i32_0 = arith.constant 0 : i32
    %c0_i32_1 = arith.constant 0 : i32
    return %2, %c0_i32_0 : i32, i32
  }
  func.func @transform_2(%arg0: i32, %arg1: i32) -> (i32, i32) {
    %c1_i32 = arith.constant 1 : i32
    %0 = arith.muli %arg0, %c1_i32 : i32
    %1 = arith.addi %0, %arg1 : i32
    %c0_i32 = arith.constant 0 : i32
    %2 = arith.minsi %1, %c0_i32 : i32
    %c0_i32_0 = arith.constant 0 : i32
    %c0_i32_1 = arith.constant 0 : i32
    return %2, %c0_i32_0 : i32, i32
  }
  func.func @transform_3(%arg0: i32, %arg1: i32) -> (i32, i32, i32) {
    %c0_i32 = arith.constant 0 : i32
    %c0_i32_0 = arith.constant 0 : i32
    %c0_i32_1 = arith.constant 0 : i32
    return %arg0, %c0_i32, %c0_i32_0 : i32, i32, i32
  }
}

</mosaic_0001>

<llo_original>
// kernel: tpu_custom_call.1
$region0: #{tpu_custom_call.1}
  #allocation0 [shape = 'u32[]', space=smem, size = 0x4, offset = 0x4, fixed_abs, tag = 'smem constant byte address 0x4 - core index']
  #allocation1 [shape = 'u32[72,128]{1,0:T(1,128)}', space=vmem, size = 0x9000, scoped, tag = 'internal scratch']
  #allocation2 [shape = 'f32[1,128]{1,0:T(1,128)}', space=vmem, size = 0x200, scoped, tag = 'scratch operand']
  %s0 = inlined_call_operand.hbm [shape: bf16[128,128], index: 0, kind: input, shape index: {}]
  %s1 = inlined_call_operand.hbm [shape: f32[16,128], index: 1, kind: input, shape index: {}]
  %s2 = inlined_call_operand.hbm [shape: f32[16,128], index: 2, kind: input, shape index: {}]
  %s3 = inlined_call_operand.hbm [shape: f32[1,1,128], index: 3, kind: output, shape index: {}]
  %s4 = sld [smem:[#allocation0]]
  $region42: #{tpu_custom_call.1} parent=0
    _
  %s6 = ssub.s32 1, %s4
  %s7 = scalar_select 0, %s6, %s4
  $region1: #{tpu_custom_call.1} parent=0
    #allocation3 [shape = 'u8[32768]{0}', space=vmem, size = 0x8000, scoped, tag = 'input window, operand 0, single buffered']
    #allocation4 [shape = 's32[1]{0}', space=sflag, size = 0x4, scoped, tag = 'scoped memory for tpu_custom_call.1']
    #allocation5 [shape = 's32[1]{0}', space=sflag, size = 0x4, scoped, tag = 'scoped memory for tpu_custom_call.1']
    #allocation6 [shape = 'u8[8192]{0}', space=vmem, size = 0x2000, scoped, tag = 'input window, operand 1, single buffered']
    #allocation7 [shape = 's32[1]{0}', space=sflag, size = 0x4, scoped, tag = 'scoped memory for tpu_custom_call.1']
    #allocation8 [shape = 'u8[8192]{0}', space=vmem, size = 0x2000, scoped, tag = 'input window, operand 2, single buffered']
    #allocation9 [shape = 'u8[512]{0}', space=vmem, size = 0x400, scoped, tag = 'output window, operand 0, single buffered']
    %8 = vsyncpa [#allocation4], 0
    %9 = vsyncpa [#allocation7], 0
    %10 = vsyncpa [#allocation5], 0
    // Predicated region
    $region2: #{tpu_custom_call.1} parent=1 // pred_check
      _
    $region3: #{tpu_custom_call.1} parent=1 // pred_check_branch
      %12 = sbr.rel (0) target = $region5
    $region4: #{tpu_custom_call.1} parent=1 // pred_region
      %14 = vsyncadd [#allocation4], 0
      %s15 = sshll.u32 %s0, 4
      %s16 = int_to_ptr.hbm [resolvable:$true] %s15
      %s17 = sshll.u32 [#allocation3], 4
      %s18 = int_to_ptr.vmem [resolvable:$true] %s17
      %23 = dma.hbm_to_vmem [thread:$0]  %s16, 1024, %s18, [#allocation4], 64, 64, 4
    $region5: #{tpu_custom_call.1} parent=1 // pred_fallthru
      _
    // Predicated region
    $region6: #{tpu_custom_call.1} parent=1 // pred_check
      _
    $region7: #{tpu_custom_call.1} parent=1 // pred_check_branch
      %25 = sbr.rel (0) target = $region9
    $region8: #{tpu_custom_call.1} parent=1 // pred_region
      %s26 = sadd.s32 0, 0
      %p27 = scmp.lt.s32.totalorder %s26, 0
      %s28 = scalar_select %p27, %s26, 0
      %s29 = smul.u32 2, %s28
      %31 = vsyncadd [#allocation7], 0
      %s32 = smul.addr %s29, 8
      %s33 = scalar_lea.hbm %s1, %s32
      %s34 = sshll.u32 %s33, 4
      %s35 = int_to_ptr.hbm [resolvable:$true] %s34
      %s36 = sshll.u32 [#allocation6], 4
      %s37 = int_to_ptr.vmem [resolvable:$true] %s36
      %42 = dma.hbm_to_vmem [thread:$0]  %s35, 256, %s37, [#allocation7], 128, 128, 8
    $region9: #{tpu_custom_call.1} parent=1 // pred_fallthru
      _
    // Predicated region
    $region10: #{tpu_custom_call.1} parent=1 // pred_check
      _
    $region11: #{tpu_custom_call.1} parent=1 // pred_check_branch
      %44 = sbr.rel (0) target = $region13
    $region12: #{tpu_custom_call.1} parent=1 // pred_region
      %s45 = sadd.s32 0, 0
      %p46 = scmp.lt.s32.totalorder %s45, 0
      %s47 = scalar_select %p46, %s45, 0
      %s48 = smul.u32 2, %s47
      %50 = vsyncadd [#allocation7], 0
      %s51 = smul.addr %s48, 8
      %s52 = scalar_lea.hbm %s2, %s51
      %s53 = sshll.u32 %s52, 4
      %s54 = int_to_ptr.hbm [resolvable:$true] %s53
      %s55 = sshll.u32 [#allocation8], 4
      %s56 = int_to_ptr.vmem [resolvable:$true] %s55
      %61 = dma.hbm_to_vmem [thread:$0]  %s54, 256, %s56, [#allocation7], 128, 128, 8
    $region13: #{tpu_custom_call.1} parent=1 // pred_fallthru
      _
    // Predicated region
    $region14: #{tpu_custom_call.1} parent=1 // pred_check
      _
    $region15: #{tpu_custom_call.1} parent=1 // pred_check_branch
      %63 = sbr.rel (0) target = $region17
    $region16: #{tpu_custom_call.1} parent=1 // pred_region
      %65 = dma.done [#allocation4], 1024
    $region17: #{tpu_custom_call.1} parent=1 // pred_fallthru
      _
    // Predicated region
    $region18: #{tpu_custom_call.1} parent=1 // pred_check
      _
    $region19: #{tpu_custom_call.1} parent=1 // pred_check_branch
      %67 = sbr.rel (0) target = $region21
    $region20: #{tpu_custom_call.1} parent=1 // pred_region
      %69 = dma.done [#allocation7], 256
    $region21: #{tpu_custom_call.1} parent=1 // pred_fallthru
      _
    // Predicated region
    $region22: #{tpu_custom_call.1} parent=1 // pred_check
      _
    $region23: #{tpu_custom_call.1} parent=1 // pred_check_branch
      %71 = sbr.rel (0) target = $region25
    $region24: #{tpu_custom_call.1} parent=1 // pred_region
      %73 = dma.done [#allocation7], 256
    $region25: #{tpu_custom_call.1} parent=1 // pred_fallthru
      _
    %s74 = sadd.s32 0, 0
    %p75 = scmp.lt.s32.totalorder %s74, 0
    %s76 = scalar_select %p75, %s74, 0
    %s77 = smul.u32 2, %s76
    %s78 = sadd.s32 0, 0
    %p79 = scmp.lt.s32.totalorder %s78, 0
    %s80 = scalar_select %p79, %s78, 0
    %s81 = smul.u32 2, %s80
    %p82 = scmp.eq.s32.totalorder 0, 0
    // Predicated region
    $region26: #{tpu_custom_call.1} parent=1 // pred_check
      %p83 = pneg %p82
    $region27: #{tpu_custom_call.1} parent=1 // pred_check_branch
      %85 = sbr.rel (%p83) target = $region29
    $region28: #{tpu_custom_call.1} parent=1 // pred_region
      %86 = vst [vmem:[#allocation2] sm:$0x1] 0.0
    $region29: #{tpu_custom_call.1} parent=1 // pred_fallthru
      _
    %v87 = vld [vmem:[#allocation3] sm:$0xf]
    %v88 = vld [vmem:[#allocation3 + $0x4] sm:$0xf]
    %v89 = vld [vmem:[#allocation3 + $0x8] sm:$0xf]
    %v90 = vld [vmem:[#allocation3 + $0xc] sm:$0xf]
    %v91 = vld [vmem:[#allocation3 + $0x10] sm:$0xf]
    %v92 = vld [vmem:[#allocation3 + $0x14] sm:$0xf]
    %v93 = vld [vmem:[#allocation3 + $0x18] sm:$0xf]
    %v94 = vld [vmem:[#allocation3 + $0x1c] sm:$0xf]
    %v95 = vld [vmem:[#allocation3 + $0x20] sm:$0xf]
    %v96 = vld [vmem:[#allocation3 + $0x24] sm:$0xf]
    %v97 = vld [vmem:[#allocation3 + $0x28] sm:$0xf]
    %v98 = vld [vmem:[#allocation3 + $0x2c] sm:$0xf]
    %v99 = vld [vmem:[#allocation3 + $0x30] sm:$0xf]
    %v100 = vld [vmem:[#allocation3 + $0x34] sm:$0xf]
    %v101 = vld [vmem:[#allocation3 + $0x38] sm:$0xf]
    %v102 = vld [vmem:[#allocation3 + $0x3c] sm:$0xf]
    %v103 = vld [vmem:[#allocation6] sm:$0xff]
    %v104 = vld [vmem:[#allocation6 + $0x8] sm:$0xff]
    %v105 = vld [vmem:[#allocation8] sm:$0xff]
    %v106 = vld [vmem:[#allocation8 + $0x8] sm:$0xff]
    %v107 = vpack.c.bf16 %v103, %v103
    %v108 = vpack.c.bf16 %v104, %v104
    %v109 = vunpack.c.l.bf16 %v107
    %v110 = vunpack.c.l.bf16 %v108
    %v111 = vsub.f32 %v103, %v109
    %v112 = vsub.f32 %v104, %v110
    %v113 = vpack.c.bf16 %v112, %v111
    %v130 = vunpack.c.l.b16 %v87
    %v131 = vunpack.c.l.b16 %v88
    %v132 = vunpack.c.l.b16 %v89
    %v133 = vunpack.c.l.b16 %v90
    %v134 = vunpack.c.l.b16 %v91
    %v135 = vunpack.c.l.b16 %v92
    %v136 = vunpack.c.l.b16 %v93
    %v137 = vunpack.c.l.b16 %v94
    %v138 = vunpack.c.l.b16 %v95
    %v139 = vunpack.c.l.b16 %v96
    %v140 = vunpack.c.l.b16 %v97
    %v141 = vunpack.c.l.b16 %v98
    %v142 = vunpack.c.l.b16 %v99
    %v143 = vunpack.c.l.b16 %v100
    %v144 = vunpack.c.l.b16 %v101
    %v145 = vunpack.c.l.b16 %v102
    %v146 = vpack.c.b16 %v131, %v130
    %v147 = vpack.c.b16 %v133, %v132
    %v148 = vpack.c.b16 %v135, %v134
    %v149 = vpack.c.b16 %v137, %v136
    %v150 = vpack.c.b16 %v139, %v138
    %v151 = vpack.c.b16 %v141, %v140
    %v152 = vpack.c.b16 %v143, %v142
    %v153 = vpack.c.b16 %v145, %v144
    %162 = vmatpush.bf16.msra.mxu0 %v153
    %163 = vmatpush.bf16.msra.mxu0 %v152
    %164 = vmatpush.bf16.msra.mxu0 %v151
    %165 = vmatpush.bf16.msra.mxu0 %v150
    %166 = vmatpush.bf16.msra.mxu0 %v149
    %167 = vmatpush.bf16.msra.mxu0 %v148
    %168 = vmatpush.bf16.msra.mxu0 %v147
    %169 = vmatpush.bf16.msra.mxu0 %v146
    %170 = vmatmul.bf16.gmra.mxu0 %v113
    %v171 = vpop.f32.mrf.mxu0
    %v172 = vadd.f32 0.0, %v171
    %v173 = vpop.f32.mrf.mxu0
    %v174 = vadd.f32 0.0, %v173
    %175 = vdwg.mxu0
    %v178 = vunpack.c.l.b16 %v107
    %v179 = vunpack.c.l.b16 %v108
    %v180 = vpack.c.b16 %v179, %v178
    %182 = vmatpush.bf16.msra.mxu0 %v153
    %183 = vmatpush.bf16.msra.mxu0 %v152
    %184 = vmatpush.bf16.msra.mxu0 %v151
    %185 = vmatpush.bf16.msra.mxu0 %v150
    %186 = vmatpush.bf16.msra.mxu0 %v149
    %187 = vmatpush.bf16.msra.mxu0 %v148
    %188 = vmatpush.bf16.msra.mxu0 %v147
    %189 = vmatpush.bf16.msra.mxu0 %v146
    %190 = vmatmul.bf16.gmra.mxu0 %v180
    %v191 = vpop.f32.mrf.mxu0
    %v192 = vadd.f32 %v172, %v191
    %v193 = vpop.f32.mrf.mxu0
    %v194 = vadd.f32 %v174, %v193
    %195 = vdwg.mxu0
    %v196 = vmul.f32 %v192, 0.25
    %v197 = vmul.f32 %v194, 0.25
    %v198 = vsub.f32 %v103, %v196
    %v199 = vsub.f32 %v104, %v197
    %v200 = vmul.f32 %v198, %v198
    %v201 = vmul.f32 %v199, %v199
    %v202 = vpack.c.bf16 %v200, %v200
    %v203 = vpack.c.bf16 %v201, %v201
    %v204 = vunpack.c.l.bf16 %v202
    %v205 = vunpack.c.l.bf16 %v203
    %v206 = vsub.f32 %v200, %v204
    %v207 = vsub.f32 %v201, %v205
    %v208 = vpack.c.bf16 %v207, %v206
    %209 = vmatpush.bf16.msra.mxu0 %v153
    %210 = vmatpush.bf16.msra.mxu0 %v152
    %211 = vmatpush.bf16.msra.mxu0 %v151
    %212 = vmatpush.bf16.msra.mxu0 %v150
    %213 = vmatpush.bf16.msra.mxu0 %v149
    %214 = vmatpush.bf16.msra.mxu0 %v148
    %215 = vmatpush.bf16.msra.mxu0 %v147
    %216 = vmatpush.bf16.msra.mxu0 %v146
    %217 = vmatmul.bf16.gmra.mxu0 %v208
    %v218 = vpop.f32.mrf.mxu0
    %v219 = vadd.f32 0.0, %v218
    %v220 = vpop.f32.mrf.mxu0
    %v221 = vadd.f32 0.0, %v220
    %222 = vdwg.mxu0
    %v225 = vunpack.c.l.b16 %v202
    %v226 = vunpack.c.l.b16 %v203
    %v227 = vpack.c.b16 %v226, %v225
    %229 = vmatpush.bf16.msra.mxu0 %v153
    %230 = vmatpush.bf16.msra.mxu0 %v152
    %231 = vmatpush.bf16.msra.mxu0 %v151
    %232 = vmatpush.bf16.msra.mxu0 %v150
    %233 = vmatpush.bf16.msra.mxu0 %v149
    %234 = vmatpush.bf16.msra.mxu0 %v148
    %235 = vmatpush.bf16.msra.mxu0 %v147
    %236 = vmatpush.bf16.msra.mxu0 %v146
    %237 = vmatmul.bf16.gmra.mxu0 %v227
    %v238 = vpop.f32.mrf.mxu0
    %v239 = vadd.f32 %v219, %v238
    %v240 = vpop.f32.mrf.mxu0
    %v241 = vadd.f32 %v221, %v240
    %242 = vdwg.mxu0
    %v243 = vmul.f32 %v239, 0.33333334
    %v244 = vmul.f32 %v241, 0.33333334
    %v245 = vrsqrt.pop %v243
    %v246 = vmul.f32 %v245, %v243
    %v247 = vmul.f32 %v246, %v245
    %v248 = vmul.f32 0.5, %v247
    %v249 = vsub.f32 1.5, %v248
    %v250 = vmul.f32 %v245, %v249
    %vm251 = vweird.f32 %v243
    %vm252 = vweird.f32 %v245
    %vm253 = vmor %vm251, %vm252
    %v254 = vsel %vm253, %v245, %v250
    %v255 = vrsqrt.pop %v244
    %v256 = vmul.f32 %v255, %v244
    %v257 = vmul.f32 %v256, %v255
    %v258 = vmul.f32 0.5, %v257
    %v259 = vsub.f32 1.5, %v258
    %v260 = vmul.f32 %v255, %v259
    %vm261 = vweird.f32 %v244
    %vm262 = vweird.f32 %v255
    %vm263 = vmor %vm261, %vm262
    %v264 = vsel %vm263, %v255, %v260
    %v265 = vmul.f32 %v198, %v254
    %v266 = vmul.f32 %v199, %v264
    %v267 = vpack.c.bf16 %v105, %v105
    %v268 = vpack.c.bf16 %v106, %v106
    %v269 = vunpack.c.l.bf16 %v267
    %v270 = vunpack.c.l.bf16 %v268
    %v271 = vsub.f32 %v105, %v269
    %v272 = vsub.f32 %v106, %v270
    %v273 = vpack.c.bf16 %v272, %v271
    %274 = vmatpush.bf16.msra.mxu0 %v153
    %275 = vmatpush.bf16.msra.mxu0 %v152
    %276 = vmatpush.bf16.msra.mxu0 %v151
    %277 = vmatpush.bf16.msra.mxu0 %v150
    %278 = vmatpush.bf16.msra.mxu0 %v149
    %279 = vmatpush.bf16.msra.mxu0 %v148
    %280 = vmatpush.bf16.msra.mxu0 %v147
    %281 = vmatpush.bf16.msra.mxu0 %v146
    %282 = vmatmul.bf16.gmra.mxu0 %v273
    %v283 = vpop.f32.mrf.mxu0
    %v284 = vadd.f32 0.0, %v283
    %v285 = vpop.f32.mrf.mxu0
    %v286 = vadd.f32 0.0, %v285
    %287 = vdwg.mxu0
    %v290 = vunpack.c.l.b16 %v267
    %v291 = vunpack.c.l.b16 %v268
    %v292 = vpack.c.b16 %v291, %v290
    %294 = vmatpush.bf16.msra.mxu0 %v153
    %295 = vmatpush.bf16.msra.mxu0 %v152
    %296 = vmatpush.bf16.msra.mxu0 %v151
    %297 = vmatpush.bf16.msra.mxu0 %v150
    %298 = vmatpush.bf16.msra.mxu0 %v149
    %299 = vmatpush.bf16.msra.mxu0 %v148
    %300 = vmatpush.bf16.msra.mxu0 %v147
    %301 = vmatpush.bf16.msra.mxu0 %v146
    %302 = vmatmul.bf16.gmra.mxu0 %v292
    %v303 = vpop.f32.mrf.mxu0
    %v304 = vadd.f32 %v284, %v303
    %v305 = vpop.f32.mrf.mxu0
    %v306 = vadd.f32 %v286, %v305
    %307 = vdwg.mxu0
    %v308 = vmul.f32 %v304, 0.25
    %v309 = vmul.f32 %v306, 0.25
    %v310 = vsub.f32 %v105, %v308
    %v311 = vsub.f32 %v106, %v309
    %v312 = vmul.f32 %v310, %v310
    %v313 = vmul.f32 %v311, %v311
    %v314 = vpack.c.bf16 %v312, %v312
    %v315 = vpack.c.bf16 %v313, %v313
    %v316 = vunpack.c.l.bf16 %v314
    %v317 = vunpack.c.l.bf16 %v315
    %v318 = vsub.f32 %v312, %v316
    %v319 = vsub.f32 %v313, %v317
    %v320 = vpack.c.bf16 %v319, %v318
    %321 = vmatpush.bf16.msra.mxu0 %v153
    %322 = vmatpush.bf16.msra.mxu0 %v152
    %323 = vmatpush.bf16.msra.mxu0 %v151
    %324 = vmatpush.bf16.msra.mxu0 %v150
    %325 = vmatpush.bf16.msra.mxu0 %v149
    %326 = vmatpush.bf16.msra.mxu0 %v148
    %327 = vmatpush.bf16.msra.mxu0 %v147
    %328 = vmatpush.bf16.msra.mxu0 %v146
    %329 = vmatmul.bf16.gmra.mxu0 %v320
    %v330 = vpop.f32.mrf.mxu0
    %v331 = vadd.f32 0.0, %v330
    %v332 = vpop.f32.mrf.mxu0
    %v333 = vadd.f32 0.0, %v332
    %334 = vdwg.mxu0
    %v337 = vunpack.c.l.b16 %v314
    %v338 = vunpack.c.l.b16 %v315
    %v339 = vpack.c.b16 %v338, %v337
    %341 = vmatpush.bf16.msra.mxu0 %v153
    %342 = vmatpush.bf16.msra.mxu0 %v152
    %343 = vmatpush.bf16.msra.mxu0 %v151
    %344 = vmatpush.bf16.msra.mxu0 %v150
    %345 = vmatpush.bf16.msra.mxu0 %v149
    %346 = vmatpush.bf16.msra.mxu0 %v148
    %347 = vmatpush.bf16.msra.mxu0 %v147
    %348 = vmatpush.bf16.msra.mxu0 %v146
    %349 = vmatmul.bf16.gmra.mxu0 %v339
    %v350 = vpop.f32.mrf.mxu0
    %v351 = vadd.f32 %v331, %v350
    %v352 = vpop.f32.mrf.mxu0
    %v353 = vadd.f32 %v333, %v352
    %354 = vdwg.mxu0
    %v355 = vmul.f32 %v351, 0.33333334
    %v356 = vmul.f32 %v353, 0.33333334
    %v357 = vrsqrt.pop %v355
    %v358 = vmul.f32 %v357, %v355
    %v359 = vmul.f32 %v358, %v357
    %v360 = vmul.f32 0.5, %v359
    %v361 = vsub.f32 1.5, %v360
    %v362 = vmul.f32 %v357, %v361
    %vm363 = vweird.f32 %v355
    %vm364 = vweird.f32 %v357
    %vm365 = vmor %vm363, %vm364
    %v366 = vsel %vm365, %v357, %v362
    %v367 = vrsqrt.pop %v356
    %v368 = vmul.f32 %v367, %v356
    %v369 = vmul.f32 %v368, %v367
    %v370 = vmul.f32 0.5, %v369
    %v371 = vsub.f32 1.5, %v370
    %v372 = vmul.f32 %v367, %v371
    %vm373 = vweird.f32 %v356
    %vm374 = vweird.f32 %v367
    %vm375 = vmor %vm373, %vm374
    %v376 = vsel %vm375, %v367, %v372
    %v377 = vmul.f32 %v310, %v366
    %v378 = vmul.f32 %v311, %v376
    %v379 = vmul.f32 %v265, 1.442695
    %v380 = vpow.pop %v379
    %v381 = vmul.f32 %v266, 1.442695
    %v382 = vpow.pop %v381
    %v383 = vmul.f32 %v377, 1.442695
    %v384 = vpow.pop %v383
    %v385 = vmul.f32 %v378, 1.442695
    %v386 = vpow.pop %v385
    %v387 = vpack.c.bf16 %v380, %v380
    %v388 = vpack.c.bf16 %v382, %v382
    %v389 = vunpack.c.l.bf16 %v387
    %v390 = vunpack.c.l.bf16 %v388
    %v391 = vsub.f32 %v380, %v389
    %v392 = vsub.f32 %v382, %v390
    %v393 = vpack.c.bf16 %v392, %v391
    %394 = vmatpush.bf16.msra.mxu0 %v153
    %395 = vmatpush.bf16.msra.mxu0 %v152
    %396 = vmatpush.bf16.msra.mxu0 %v151
    %397 = vmatpush.bf16.msra.mxu0 %v150
    %398 = vmatpush.bf16.msra.mxu0 %v149
    %399 = vmatpush.bf16.msra.mxu0 %v148
    %400 = vmatpush.bf16.msra.mxu0 %v147
    %401 = vmatpush.bf16.msra.mxu0 %v146
    %402 = vmatmul.bf16.gmra.mxu0 %v393
    %v403 = vpop.f32.mrf.mxu0
    %v404 = vadd.f32 0.0, %v403
    %v405 = vpop.f32.mrf.mxu0
    %v406 = vadd.f32 0.0, %v405
    %407 = vdwg.mxu0
    %v410 = vunpack.c.l.b16 %v387
    %v411 = vunpack.c.l.b16 %v388
    %v412 = vpack.c.b16 %v411, %v410
    %414 = vmatpush.bf16.msra.mxu0 %v153
    %415 = vmatpush.bf16.msra.mxu0 %v152
    %416 = vmatpush.bf16.msra.mxu0 %v151
    %417 = vmatpush.bf16.msra.mxu0 %v150
    %418 = vmatpush.bf16.msra.mxu0 %v149
    %419 = vmatpush.bf16.msra.mxu0 %v148
    %420 = vmatpush.bf16.msra.mxu0 %v147
    %421 = vmatpush.bf16.msra.mxu0 %v146
    %422 = vmatmul.bf16.gmra.mxu0 %v412
    %v423 = vpop.f32.mrf.mxu0
    %v424 = vadd.f32 %v404, %v423
    %v425 = vpop.f32.mrf.mxu0
    %v426 = vadd.f32 %v406, %v425
    %427 = vdwg.mxu0
    %v428 = vpack.c.bf16 %v384, %v384
    %v429 = vpack.c.bf16 %v386, %v386
    %v430 = vunpack.c.l.bf16 %v428
    %v431 = vunpack.c.l.bf16 %v429
    %v432 = vsub.f32 %v384, %v430
    %v433 = vsub.f32 %v386, %v431
    %v434 = vpack.c.bf16 %v433, %v432
    %435 = vmatpush.bf16.msra.mxu0 %v153
    %436 = vmatpush.bf16.msra.mxu0 %v152
    %437 = vmatpush.bf16.msra.mxu0 %v151
    %438 = vmatpush.bf16.msra.mxu0 %v150
    %439 = vmatpush.bf16.msra.mxu0 %v149
    %440 = vmatpush.bf16.msra.mxu0 %v148
    %441 = vmatpush.bf16.msra.mxu0 %v147
    %442 = vmatpush.bf16.msra.mxu0 %v146
    %443 = vmatmul.bf16.gmra.mxu0 %v434
    %v444 = vpop.f32.mrf.mxu0
    %v445 = vadd.f32 0.0, %v444
    %v446 = vpop.f32.mrf.mxu0
    %v447 = vadd.f32 0.0, %v446
    %448 = vdwg.mxu0
    %v451 = vunpack.c.l.b16 %v428
    %v452 = vunpack.c.l.b16 %v429
    %v453 = vpack.c.b16 %v452, %v451
    %455 = vmatpush.bf16.msra.mxu0 %v153
    %456 = vmatpush.bf16.msra.mxu0 %v152
    %457 = vmatpush.bf16.msra.mxu0 %v151
    %458 = vmatpush.bf16.msra.mxu0 %v150
    %459 = vmatpush.bf16.msra.mxu0 %v149
    %460 = vmatpush.bf16.msra.mxu0 %v148
    %461 = vmatpush.bf16.msra.mxu0 %v147
    %462 = vmatpush.bf16.msra.mxu0 %v146
    %463 = vmatmul.bf16.gmra.mxu0 %v453
    %v464 = vpop.f32.mrf.mxu0
    %v465 = vadd.f32 %v445, %v464
    %v466 = vpop.f32.mrf.mxu0
    %v467 = vadd.f32 %v447, %v466
    %468 = vdwg.mxu0
    %v469 = vrcp.pop %v424
    %v470 = vmul.f32 %v424, %v469
    %v471 = vsub.f32 1.0, %v470
    %v472 = vmul.f32 %v469, %v471
    %v473 = vadd.f32 %v469, %v472
    %vm474 = vweird.f32 %v424
    %vm475 = vweird.f32 %v469
    %vm476 = vmor %vm474, %vm475
    %v477 = vsel %vm476, %v469, %v473
    %v478 = vand.u32 2147483647, %v424
    %vm479 = vcmp.eq.f32.partialorder %v478, 8.507059e+37
    %v480 = vand.u32 %v424, 2147483648
    %v481 = vor.u32 1.1754944e-38, %v480
    %v482 = vsel %vm479, %v481, %v477
    %v483 = vrcp.pop %v426
    %v484 = vmul.f32 %v426, %v483
    %v485 = vsub.f32 1.0, %v484
    %v486 = vmul.f32 %v483, %v485
    %v487 = vadd.f32 %v483, %v486
    %vm488 = vweird.f32 %v426
    %vm489 = vweird.f32 %v483
    %vm490 = vmor %vm488, %vm489
    %v491 = vsel %vm490, %v483, %v487
    %v492 = vand.u32 2147483647, %v426
    %vm493 = vcmp.eq.f32.partialorder %v492, 8.507059e+37
    %v494 = vand.u32 %v426, 2147483648
    %v495 = vor.u32 1.1754944e-38, %v494
    %v496 = vsel %vm493, %v495, %v491
    %v497 = vmul.f32 %v380, %v482
    %v498 = vmul.f32 %v382, %v496
    %v499 = vsub.f32 %v265, %v377
    %v500 = vsub.f32 %v266, %v378
    %v501 = vmul.f32 %v497, %v499
    %v502 = vmul.f32 %v498, %v500
    %v503 = vmul.f32 %v465, %v482
    %v504 = vmul.f32 %v467, %v496
    %v505 = vlog2.pop %v503
    %v506 = vmul.f32 %v505, 0.6931472
    %v507 = vlog2.pop %v504
    %v508 = vmul.f32 %v507, 0.6931472
    %v509 = vmul.f32 %v506, 0.25
    %v510 = vmul.f32 %v508, 0.25
    %v511 = vadd.f32 %v501, %v509
    %v512 = vadd.f32 %v502, %v510
    %v513 = vld [vmem:[#allocation2] sm:$0x1]
    %v514 = vadd.f32 %v511, %v512
    %v515 = vrot.slane %v514, 4
    %v516 = vadd.f32 %v514, %v515
    %v517 = vrot.slane %v516, 2
    %v518 = vadd.f32 %v516, %v517
    %v519 = vrot.slane %v518, 1
    %v520 = vadd.f32 %v518, %v519
    %v521 = vadd.f32 %v513, %v520
    %522 = vst [vmem:[#allocation2] sm:$0x1] %v521
    // Predicated region
    $region30: #{tpu_custom_call.1} parent=1 // pred_check
      %p523 = pneg %p82
    $region31: #{tpu_custom_call.1} parent=1 // pred_check_branch
      %525 = sbr.rel (%p523) target = $region33
    $region32: #{tpu_custom_call.1} parent=1 // pred_region
      %v526 = vld [vmem:[#allocation2] sm:$0x1]
      %527 = vst [vmem:[#allocation9] sm:$0x1] %v526
    $region33: #{tpu_custom_call.1} parent=1 // pred_fallthru
      _
    // Predicated region
    $region34: #{tpu_custom_call.1} parent=1 // pred_check
      _
    $region35: #{tpu_custom_call.1} parent=1 // pred_check_branch
      %529 = sbr.rel (0) target = $region37
    $region36: #{tpu_custom_call.1} parent=1 // pred_region
      %531 = vsyncadd [#allocation5], 0
      %s533 = sshll.u32 [#allocation9], 4
      %s534 = int_to_ptr.vmem [resolvable:$true] %s533
      %s535 = sshll.u32 %s3, 4
      %s536 = int_to_ptr.hbm [resolvable:$true] %s535
      %538 = dma.vmem_to_hbm [thread:$0]  %s534, 16, %s536, [#allocation5]
    $region37: #{tpu_custom_call.1} parent=1 // pred_fallthru
      _
    // Predicated region
    $region38: #{tpu_custom_call.1} parent=1 // pred_check
      _
    $region39: #{tpu_custom_call.1} parent=1 // pred_check_branch
      %540 = sbr.rel (0) target = $region41
    $region40: #{tpu_custom_call.1} parent=1 // pred_region
      %542 = dma.done [#allocation5], 16
    $region41: #{tpu_custom_call.1} parent=1 // pred_fallthru
      _
    %543 = vsyncpa [#allocation4], 1
    %544 = vsyncpa [#allocation7], 1
    %545 = vsyncpa [#allocation5], 1

</llo_original>
